<compile_context>
chip_gen: v6e
topology: v6e:2x2x1
jax: 0.10.0
libtpu: 0.0.40
codegen_flags: <defaults>
</compile_context>

<pallas_src>
import functools

import jax
import jax.numpy as jnp
from jax.experimental import pallas as pl
from jax.experimental.pallas import tpu as pltpu

_GRANULE = 512  # N-tile granule: multiple of 128 (lane-dense, unmasked stores)


# --------------------------------------------------------------------------- kernel
def _edgenet_kernel(xT_ref, w1_ref, t1_ref, w2_ref, t2_ref, w3_ref, t3_ref, o_ref):
    # Layer 1: (L, F) @ (F, T) -> (L, T); bf16 operands, f32 MXU accumulation.
    h = jnp.dot(w1_ref[...], xT_ref[...], preferred_element_type=jnp.float32)
    h = jnp.maximum(h + t1_ref[...], 0.0)          # folded BN shift + ReLU (f32)

    # Layer 2.
    h = jnp.dot(w2_ref[...], h.astype(w2_ref.dtype), preferred_element_type=jnp.float32)
    h = jnp.maximum(h + t2_ref[...], 0.0)

    # Layer 3.
    h = jnp.dot(w3_ref[...], h.astype(w3_ref.dtype), preferred_element_type=jnp.float32)
    h = jnp.maximum(h + t3_ref[...], 0.0)

    o_ref[...] = h.astype(o_ref.dtype)


# --------------------------------------------------------------------------- tiling
def _choose_tiling(n, tile_n_max):
    """Pick (tile_n, n_pad).  Small N -> single tile; large N -> even grid so
    both v7x TensorCores get equal work."""
    n_g = pl.cdiv(n, _GRANULE) * _GRANULE
    if n_g <= tile_n_max:
        return n_g, n_g
    grid = pl.cdiv(n_g, tile_n_max)
    if grid % 2:
        grid += 1                                   # even 1-D grid for v7x megacore
    tile = pl.cdiv(pl.cdiv(n_g, grid), _GRANULE) * _GRANULE
    return tile, grid * tile


# --------------------------------------------------------------------------- core entry
def edgenet_feature_major(xT, params, *, tile_n):
    """Feature-major entry: xT is (f_in, N_pad) in the kernel io dtype with
    N_pad % tile_n == 0.  Returns (layer_size, N_pad).  No layout copies."""
    f_in, n_pad = xT.shape
    assert n_pad % tile_n == 0, "N_pad must be a multiple of tile_n"
    assert params["w1"].shape[1] == f_in, "w1 must be (layer_size, 2*in_size)"
    layer_size = params["w1"].shape[0]
    io_dtype = xT.dtype
    itemsize = jnp.dtype(io_dtype).itemsize

    col_spec = lambda shape: pl.BlockSpec(shape, lambda i: (0, i))
    full_spec = lambda shape: pl.BlockSpec(shape, lambda i: (0, 0))

    in_specs = [col_spec((f_in, tile_n))]
    args = [xT]
    const_bytes = 0
    for k in ("1", "2", "3"):
        w = params["w" + k]                         # (out, in), already io_dtype
        t = params["t" + k]                         # (out, 1),  already f32
        in_specs += [full_spec(w.shape), full_spec(t.shape)]
        args += [w, t]
        const_bytes += int(w.size) * w.dtype.itemsize + int(t.size) * t.dtype.itemsize

    # Cost / VMEM budgeting.
    flops = 2 * n_pad * layer_size * (f_in + 2 * layer_size)
    bytes_accessed = (f_in + layer_size) * n_pad * itemsize + const_bytes
    vmem_est = (
        2 * tile_n * itemsize * (f_in + layer_size)     # double-buffered in/out blocks
        + 3 * layer_size * tile_n * 4                   # live f32 intermediates
        + 2 * const_bytes                               # weights / shifts
    )
    vmem_limit = int(min(48 << 20, max(32 << 20, 2 * vmem_est)))  # < v7x 64 MiB physical

    return pl.pallas_call(
        _edgenet_kernel,
        out_shape=jax.ShapeDtypeStruct((layer_size, n_pad), io_dtype),
        grid_spec=pltpu.PrefetchScalarGridSpec(
            num_scalar_prefetch=0,
            grid=(n_pad // tile_n,),
            in_specs=in_specs,
            out_specs=col_spec((layer_size, tile_n)),
        ),
        compiler_params=pltpu.CompilerParams(
            dimension_semantics=("parallel",),
            vmem_limit_bytes=vmem_limit,
        ),
        cost_estimate=pl.CostEstimate(
            flops=int(flops), transcendentals=0, bytes_accessed=int(bytes_accessed)),
    )(*args)


# --------------------------------------------------------------------------- jitted convenience wrapper
@functools.partial(jax.jit, static_argnames=("tile_n_max",))
def particlenet_edgenet(x, params, *, tile_n_max=8192):
    """Convenience entry: x (N, 2*in_size) f32 -> (N, layer_size) in io dtype.

    jit fuses transpose+cast+pad into a single HBM copy (and the final
    slice+transpose into another); bandwidth-critical producers should call
    edgenet_feature_major directly with a feature-major (F, N_pad) input.
    """
    n, _ = x.shape
    io_dtype = params["w1"].dtype
    tile_n, n_pad = _choose_tiling(n, tile_n_max)

    xT = x.T.astype(io_dtype)                       # (f_in, N): edges on the lane axis
    if n_pad != n:
        xT = jnp.pad(xT, ((0, 0), (0, n_pad - n)))

    outT = edgenet_feature_major(xT, params, tile_n=tile_n)
    # Pad columns hold nonzero garbage (relu of folded-BN shift): slice them off.
    return outT[:, :n].T


# --------------------------------------------------------------------------- parameters
def _init_params(key, in_size, layer_size, eps=1e-5, io_dtype=jnp.bfloat16):
    """Synthetic Linear + BatchNorm1d parameters.  BN is folded into the Linear
    and weights/shifts are cast ONCE here (no per-call casts)."""
    dims = [(layer_size, 2 * in_size), (layer_size, layer_size), (layer_size, layer_size)]
    params = {}
    for idx, (fo, fi) in enumerate(dims, start=1):
        key, kw, kb, kg, kbe, km, kv = jax.random.split(key, 7)
        w = jax.random.normal(kw, (fo, fi), jnp.float32) * (1.0 / jnp.sqrt(fi))  # (out, in)
        b = jax.random.normal(kb, (fo,), jnp.float32) * 0.1
        gamma = 1.0 + 0.1 * jax.random.normal(kg, (fo,), jnp.float32)
        beta = 0.1 * jax.random.normal(kbe, (fo,), jnp.float32)
        rmean = 0.1 * jax.random.normal(km, (fo,), jnp.float32)
        rvar = 1.0 + 0.1 * jax.random.uniform(kv, (fo,), jnp.float32)
        s = gamma / jnp.sqrt(rvar + eps)
        t = beta - rmean * s
        # Fold BN into the Linear:  bn(Wx + b) = (s*W) x + (s*b + t)
        params[f"w{idx}"] = (w * s[:, None]).astype(io_dtype)       # (out, in), bf16
        params[f"t{idx}"] = ((s * b + t)[:, None]).astype(jnp.float32)  # (out, 1), f32
    return params


def _reference(x, params):
    """Pure-JAX reference mirroring the kernel's bf16-in / f32-accumulate precision."""
    io_dtype = params["w1"].dtype
    h = x.astype(io_dtype).astype(jnp.float32)
    for k in ("1", "2", "3"):
        w = params["w" + k].astype(jnp.float32)                    # (out, in)
        t = params["t" + k][:, 0]
        h = jnp.maximum(h @ w.T + t, 0.0)
        h = h.astype(io_dtype).astype(jnp.float32)                 # mirror bf16 hand-off
    return h


if __name__ == "__main__":
    in_size = 8            # -> linear input = in_size * 2 = 16
    layer_size = 32
    n = 1000               # deliberately NOT a multiple of the tile granule: exercises padding

    key = jax.random.PRNGKey(0)
    kx, kp = jax.random.split(key)
    x = jax.random.normal(kx, (n, 2 * in_size), jnp.float32)
    params = _init_params(kp, in_size, layer_size)

    out = particlenet_edgenet(x, params)           # jitted: layout copies fuse
    out = jax.block_until_ready(out)

    ref = _reference(x, params)
    assert out.shape == (n, layer_size)
    assert jnp.allclose(out.astype(jnp.float32), ref, atol=1e-2, rtol=1e-2), "mismatch vs reference"
    print("KERNEL_OK")
</pallas_src>

<mosaic_0001>
module attributes {stable_mosaic.version = 11 : i64} {
  func.func @_edgenet_kernel(%arg0: i32, %arg1: memref<16x1024xbf16, #tpu.memory_space<vmem>>, %arg2: memref<32x16xbf16, #tpu.memory_space<vmem>>, %arg3: memref<32x1xf32, #tpu.memory_space<vmem>>, %arg4: memref<32x32xbf16, #tpu.memory_space<vmem>>, %arg5: memref<32x1xf32, #tpu.memory_space<vmem>>, %arg6: memref<32x32xbf16, #tpu.memory_space<vmem>>, %arg7: memref<32x1xf32, #tpu.memory_space<vmem>>, %arg8: memref<32x1024xbf16, #tpu.memory_space<vmem>>) attributes {dimension_semantics = [#tpu.dimension_semantics<parallel>], iteration_bounds = array<i64: 1>, scalar_prefetch = 0 : i64, scratch_operands = 0 : i64, tpu.core_type = #tpu.core_type<tc>, window_params = [{transform_indices = @transform_0, window_bounds = array<i64: 16, 1024>}, {pipeline_mode = #tpu.pipeline_mode<synchronous>, transform_indices = @transform_1, window_bounds = array<i64: 32, 16>}, {pipeline_mode = #tpu.pipeline_mode<synchronous>, transform_indices = @transform_2, window_bounds = array<i64: 32, 1>}, {pipeline_mode = #tpu.pipeline_mode<synchronous>, transform_indices = @transform_3, window_bounds = array<i64: 32, 32>}, {pipeline_mode = #tpu.pipeline_mode<synchronous>, transform_indices = @transform_4, window_bounds = array<i64: 32, 1>}, {pipeline_mode = #tpu.pipeline_mode<synchronous>, transform_indices = @transform_5, window_bounds = array<i64: 32, 32>}, {pipeline_mode = #tpu.pipeline_mode<synchronous>, transform_indices = @transform_6, window_bounds = array<i64: 32, 1>}, {transform_indices = @transform_7, window_bounds = array<i64: 32, 1024>}]} {
    %c0 = arith.constant 0 : index
    %c0_0 = arith.constant 0 : index
    %0 = vector.load %arg2[%c0, %c0_0] : memref<32x16xbf16, #tpu.memory_space<vmem>>, vector<32x16xbf16>
    %c0_1 = arith.constant 0 : index
    %c0_2 = arith.constant 0 : index
    %1 = vector.load %arg1[%c0_1, %c0_2] : memref<16x1024xbf16, #tpu.memory_space<vmem>>, vector<16x1024xbf16>
    %cst = arith.constant dense<0.000000e+00> : vector<32x1024xf32>
    %2 = tpu.matmul %0, %1, %cst {dimension_numbers = #tpu.dot_dimension_numbers<[1], [0], [0], [1], [0, 0, 1, 1], [], []>} : vector<32x16xbf16>, vector<16x1024xbf16>, vector<32x1024xf32> -> vector<32x1024xf32>
    %c0_3 = arith.constant 0 : index
    %c0_4 = arith.constant 0 : index
    %3 = vector.load %arg3[%c0_3, %c0_4] : memref<32x1xf32, #tpu.memory_space<vmem>>, vector<32x1xf32>
    %4 = vector.broadcast %3 : vector<32x1xf32> to vector<32x1024xf32>
    %5 = arith.addf %2, %4 : vector<32x1024xf32>
    %cst_5 = arith.constant 0.000000e+00 : f32
    %6 = vector.broadcast %cst_5 : f32 to vector<32x1024xf32>
    %7 = arith.maximumf %5, %6 : vector<32x1024xf32>
    %c0_6 = arith.constant 0 : index
    %c0_7 = arith.constant 0 : index
    %8 = vector.load %arg4[%c0_6, %c0_7] : memref<32x32xbf16, #tpu.memory_space<vmem>>, vector<32x32xbf16>
    %9 = arith.truncf %7 : vector<32x1024xf32> to vector<32x1024xbf16>
    %cst_8 = arith.constant dense<0.000000e+00> : vector<32x1024xf32>
    %10 = tpu.matmul %8, %9, %cst_8 {dimension_numbers = #tpu.dot_dimension_numbers<[1], [0], [0], [1], [0, 0, 1, 1], [], []>} : vector<32x32xbf16>, vector<32x1024xbf16>, vector<32x1024xf32> -> vector<32x1024xf32>
    %c0_9 = arith.constant 0 : index
    %c0_10 = arith.constant 0 : index
    %11 = vector.load %arg5[%c0_9, %c0_10] : memref<32x1xf32, #tpu.memory_space<vmem>>, vector<32x1xf32>
    %12 = vector.broadcast %11 : vector<32x1xf32> to vector<32x1024xf32>
    %13 = arith.addf %10, %12 : vector<32x1024xf32>
    %cst_11 = arith.constant 0.000000e+00 : f32
    %14 = vector.broadcast %cst_11 : f32 to vector<32x1024xf32>
    %15 = arith.maximumf %13, %14 : vector<32x1024xf32>
    %c0_12 = arith.constant 0 : index
    %c0_13 = arith.constant 0 : index
    %16 = vector.load %arg6[%c0_12, %c0_13] : memref<32x32xbf16, #tpu.memory_space<vmem>>, vector<32x32xbf16>
    %17 = arith.truncf %15 : vector<32x1024xf32> to vector<32x1024xbf16>
    %cst_14 = arith.constant dense<0.000000e+00> : vector<32x1024xf32>
    %18 = tpu.matmul %16, %17, %cst_14 {dimension_numbers = #tpu.dot_dimension_numbers<[1], [0], [0], [1], [0, 0, 1, 1], [], []>} : vector<32x32xbf16>, vector<32x1024xbf16>, vector<32x1024xf32> -> vector<32x1024xf32>
    %c0_15 = arith.constant 0 : index
    %c0_16 = arith.constant 0 : index
    %19 = vector.load %arg7[%c0_15, %c0_16] : memref<32x1xf32, #tpu.memory_space<vmem>>, vector<32x1xf32>
    %20 = vector.broadcast %19 : vector<32x1xf32> to vector<32x1024xf32>
    %21 = arith.addf %18, %20 : vector<32x1024xf32>
    %cst_17 = arith.constant 0.000000e+00 : f32
    %22 = vector.broadcast %cst_17 : f32 to vector<32x1024xf32>
    %23 = arith.maximumf %21, %22 : vector<32x1024xf32>
    %24 = arith.truncf %23 : vector<32x1024xf32> to vector<32x1024xbf16>
    %c0_18 = arith.constant 0 : index
    %c0_19 = arith.constant 0 : index
    %25 = vector.load %arg8[%c0_18, %c0_19] : memref<32x1024xbf16, #tpu.memory_space<vmem>>, vector<32x1024xbf16>
    tpu.vector_store %arg8[%c0_18, %c0_19], %24 {strides = array<i32>} : memref<32x1024xbf16, #tpu.memory_space<vmem>>, vector<32x1024xbf16>,
    return
  }
  func.func @transform_0(%arg0: i32) -> (i32, i32) {
    %c0_i32 = arith.constant 0 : i32
    %c0_i32_0 = arith.constant 0 : i32
    return %c0_i32, %arg0 : i32, i32
  }
  func.func @transform_1(%arg0: i32) -> (i32, i32) {
    %c0_i32 = arith.constant 0 : i32
    %c0_i32_0 = arith.constant 0 : i32
    %c0_i32_1 = arith.constant 0 : i32
    return %c0_i32, %c0_i32_0 : i32, i32
  }
  func.func @transform_2(%arg0: i32) -> (i32, i32) {
    %c0_i32 = arith.constant 0 : i32
    %c0_i32_0 = arith.constant 0 : i32
    %c0_i32_1 = arith.constant 0 : i32
    return %c0_i32, %c0_i32_0 : i32, i32
  }
  func.func @transform_3(%arg0: i32) -> (i32, i32) {
    %c0_i32 = arith.constant 0 : i32
    %c0_i32_0 = arith.constant 0 : i32
    %c0_i32_1 = arith.constant 0 : i32
    return %c0_i32, %c0_i32_0 : i32, i32
  }
  func.func @transform_4(%arg0: i32) -> (i32, i32) {
    %c0_i32 = arith.constant 0 : i32
    %c0_i32_0 = arith.constant 0 : i32
    %c0_i32_1 = arith.constant 0 : i32
    return %c0_i32, %c0_i32_0 : i32, i32
  }
  func.func @transform_5(%arg0: i32) -> (i32, i32) {
    %c0_i32 = arith.constant 0 : i32
    %c0_i32_0 = arith.constant 0 : i32
    %c0_i32_1 = arith.constant 0 : i32
    return %c0_i32, %c0_i32_0 : i32, i32
  }
  func.func @transform_6(%arg0: i32) -> (i32, i32) {
    %c0_i32 = arith.constant 0 : i32
    %c0_i32_0 = arith.constant 0 : i32
    %c0_i32_1 = arith.constant 0 : i32
    return %c0_i32, %c0_i32_0 : i32, i32
  }
  func.func @transform_7(%arg0: i32) -> (i32, i32) {
    %c0_i32 = arith.constant 0 : i32
    %c0_i32_0 = arith.constant 0 : i32
    return %c0_i32, %arg0 : i32, i32
  }
}

</mosaic_0001>

<llo_original>
// kernel: particlenet_edgenet.1
$region0: #{particlenet_edgenet.1}
  #allocation0 [shape = 'u32[]', space=smem, size = 0x4, offset = 0x4, fixed_abs, tag = 'smem constant byte address 0x4 - core index']
  #allocation1 [shape = 'u32[144,128]{1,0:T(1,128)}', space=vmem, size = 0x12000, scoped, tag = 'internal scratch']
  %s0 = inlined_call_operand.vmem [shape: bf16[16,1024], index: 0, kind: input, shape index: {}]
  %s1 = inlined_call_operand.vmem [shape: bf16[32,16], index: 1, kind: input, shape index: {}]
  %s2 = inlined_call_operand.vmem [shape: f32[32,1], index: 2, kind: input, shape index: {}]
  %s3 = inlined_call_operand.vmem [shape: bf16[32,32], index: 3, kind: input, shape index: {}]
  %s4 = inlined_call_operand.vmem [shape: f32[32,1], index: 4, kind: input, shape index: {}]
  %s5 = inlined_call_operand.vmem [shape: bf16[32,32], index: 5, kind: input, shape index: {}]
  %s6 = inlined_call_operand.vmem [shape: f32[32,1], index: 6, kind: input, shape index: {}]
  %s7 = inlined_call_operand.vmem [shape: bf16[32,1024], index: 7, kind: output, shape index: {}]
  %s8 = sld [smem:[#allocation0]]
  $region38: #{particlenet_edgenet.1} parent=0
    _
  %s10 = ssub.s32 1, %s8
  %s11 = scalar_select 0, %s10, %s8
  // Predicated region
  $region2: #{particlenet_edgenet.1} parent=0 // pred_check
    _
  $region3: #{particlenet_edgenet.1} parent=0 // pred_check_branch
    %13 = sbr.rel (0) target = $region5
  $region4: #{particlenet_edgenet.1} parent=0 // pred_region
    _
  $region5: #{particlenet_edgenet.1} parent=0 // pred_fallthru
    _
  // Predicated region
  $region6: #{particlenet_edgenet.1} parent=0 // pred_check
    _
  $region7: #{particlenet_edgenet.1} parent=0 // pred_check_branch
    %15 = sbr.rel (0) target = $region9
  $region8: #{particlenet_edgenet.1} parent=0 // pred_region
    _
  $region9: #{particlenet_edgenet.1} parent=0 // pred_fallthru
    _
  // Predicated region
  $region10: #{particlenet_edgenet.1} parent=0 // pred_check
    _
  $region11: #{particlenet_edgenet.1} parent=0 // pred_check_branch
    %17 = sbr.rel (0) target = $region13
  $region12: #{particlenet_edgenet.1} parent=0 // pred_region
    _
  $region13: #{particlenet_edgenet.1} parent=0 // pred_fallthru
    _
  // Predicated region
  $region14: #{particlenet_edgenet.1} parent=0 // pred_check
    _
  $region15: #{particlenet_edgenet.1} parent=0 // pred_check_branch
    %19 = sbr.rel (0) target = $region17
  $region16: #{particlenet_edgenet.1} parent=0 // pred_region
    _
  $region17: #{particlenet_edgenet.1} parent=0 // pred_fallthru
    _
  // Predicated region
  $region18: #{particlenet_edgenet.1} parent=0 // pred_check
    _
  $region19: #{particlenet_edgenet.1} parent=0 // pred_check_branch
    %21 = sbr.rel (0) target = $region21
  $region20: #{particlenet_edgenet.1} parent=0 // pred_region
    _
  $region21: #{particlenet_edgenet.1} parent=0 // pred_fallthru
    _
  // Predicated region
  $region22: #{particlenet_edgenet.1} parent=0 // pred_check
    _
  $region23: #{particlenet_edgenet.1} parent=0 // pred_check_branch
    %23 = sbr.rel (0) target = $region25
  $region24: #{particlenet_edgenet.1} parent=0 // pred_region
    _
  $region25: #{particlenet_edgenet.1} parent=0 // pred_fallthru
    _
  // Predicated region
  $region26: #{particlenet_edgenet.1} parent=0 // pred_check
    _
  $region27: #{particlenet_edgenet.1} parent=0 // pred_check_branch
    %25 = sbr.rel (0) target = $region29
  $region28: #{particlenet_edgenet.1} parent=0 // pred_region
    _
  $region29: #{particlenet_edgenet.1} parent=0 // pred_fallthru
    _
  %v27 = vld [vmem:[%s1] sm:$0xf]
  %v28 = vld [vmem:[%s1 + $0x4] sm:$0xf]
  %v29 = vld [vmem:[%s1 + $0x8] sm:$0xf]
  %v30 = vld [vmem:[%s1 + $0xc] sm:$0xf]
  %v31 = vld [vmem:[%s0] sm:$0xff]
  %v32 = vld [vmem:[%s0 + $0x8] sm:$0xff]
  %v33 = vld [vmem:[%s0 + $0x10] sm:$0xff]
  %v34 = vld [vmem:[%s0 + $0x18] sm:$0xff]
  %v35 = vld [vmem:[%s0 + $0x20] sm:$0xff]
  %v36 = vld [vmem:[%s0 + $0x28] sm:$0xff]
  %v37 = vld [vmem:[%s0 + $0x30] sm:$0xff]
  %v38 = vld [vmem:[%s0 + $0x38] sm:$0xff]
  %v39 = vld [vmem:[%s2] sm:$0xff]
  %v40 = vld [vmem:[%s2 + $0x8] sm:$0xff]
  %v41 = vld [vmem:[%s2 + $0x10] sm:$0xff]
  %v42 = vld [vmem:[%s2 + $0x18] sm:$0xff]
  %44 = vset.pattern.permute.xlu0 0
  %45 = vperm.xlu0 %44, %v39
  %v46 = vpop.permute.xlu0 %45
  %49 = vset.pattern.permute.xlu0 0
  %50 = vperm.xlu0 %49, %v40
  %v51 = vpop.permute.xlu0 %50
  %54 = vset.pattern.permute.xlu0 0
  %55 = vperm.xlu0 %54, %v41
  %v56 = vpop.permute.xlu0 %55
  %59 = vset.pattern.permute.xlu0 0
  %60 = vperm.xlu0 %59, %v42
  %v61 = vpop.permute.xlu0 %60
  %v67 = vunpack.c.l.b16 %v27
  %v68 = vunpack.c.l.b16 %v28
  %v69 = vunpack.c.l.b16 %v29
  %v70 = vunpack.c.l.b16 %v30
  %v71 = vpack.c.b16 %v68, %v67
  %v72 = vpack.c.b16 %v70, %v69
  %v81 = vunpack.c.l.b16 %v31
  %v82 = vunpack.c.h.b16 %v31
  %v83 = vunpack.c.l.b16 %v32
  %v84 = vunpack.c.h.b16 %v32
  %v85 = vunpack.c.l.b16 %v33
  %v86 = vunpack.c.h.b16 %v33
  %v87 = vunpack.c.l.b16 %v34
  %v88 = vunpack.c.h.b16 %v34
  %v89 = vunpack.c.l.b16 %v35
  %v90 = vunpack.c.h.b16 %v35
  %v91 = vunpack.c.l.b16 %v36
  %v92 = vunpack.c.h.b16 %v36
  %v93 = vunpack.c.l.b16 %v37
  %v94 = vunpack.c.h.b16 %v37
  %v95 = vunpack.c.l.b16 %v38
  %v96 = vunpack.c.h.b16 %v38
  %v97 = vpack.c.b16 %v89, %v81
  %v98 = vpack.c.b16 %v90, %v82
  %v99 = vpack.c.b16 %v91, %v83
  %v100 = vpack.c.b16 %v92, %v84
  %v101 = vpack.c.b16 %v93, %v85
  %v102 = vpack.c.b16 %v94, %v86
  %v103 = vpack.c.b16 %v95, %v87
  %v104 = vpack.c.b16 %v96, %v88
  %vm113 = vcmask 130048
  %v115 = vsel %vm113, %v71, 0
  %v118 = vsel %vm113, %v72, 0
  %120 = vmatprep.subr.bf16.mxu0 0
  %121 = vmatpush1.bf16.msra.mxu0 0
  %122 = vmatprep.subr.bf16.mxu0 0
  %123 = vmatpush1.bf16.msra.mxu0 0
  %124 = vmatprep.subr.bf16.mxu0 0
  %125 = vmatpush1.bf16.msra.mxu0 0
  %126 = vmatprep.subr.bf16.mxu0 0
  %127 = vmatpush1.bf16.msra.mxu0 0
  %128 = vmatprep.subr.bf16.mxu0 0
  %129 = vmatpush1.bf16.msra.mxu0 0
  %130 = vmatprep.subr.bf16.mxu0 0
  %131 = vmatpush1.bf16.msra.mxu0 0
  %132 = vmatprep.subr.bf16.mxu0 0
  %133 = vmatpush1.bf16.msra.mxu0 0
  %134 = vmatprep.subr.bf16.mxu0 %v98
  %135 = vmatpush1.bf16.msra.mxu0 %v97
  %136 = vmatprep.subr.bf16.mxu0 0
  %137 = vmatpush2.bf16.msra.mxu0 0
  %138 = vmatprep.subr.bf16.mxu0 0
  %139 = vmatpush2.bf16.msra.mxu0 0
  %140 = vmatprep.subr.bf16.mxu0 0
  %141 = vmatpush2.bf16.msra.mxu0 0
  %142 = vmatprep.subr.bf16.mxu0 0
  %143 = vmatpush2.bf16.msra.mxu0 0
  %144 = vmatprep.subr.bf16.mxu0 0
  %145 = vmatpush2.bf16.msra.mxu0 0
  %146 = vmatprep.subr.bf16.mxu0 0
  %147 = vmatpush2.bf16.msra.mxu0 0
  %148 = vmatprep.subr.bf16.mxu0 0
  %149 = vmatpush2.bf16.msra.mxu0 0
  %150 = vmatprep.subr.bf16.mxu0 0
  %151 = vmatpush2.bf16.msra.mxu0 0
  %152 = vmatprep.mubr.bf16.mxu0 0
  %153 = vmatmul.mubr.bf16.gmra.mxu0 %v115
  %v154 = vpop.f32.mrf.mxu0
  %v155 = vadd.f32 %v46, %v154
  %v156 = vpop.f32.mrf.mxu0
  %v157 = vadd.f32 %v46, %v156
  %v158 = vpop.f32.mrf.mxu0
  %v159 = vadd.f32 %v51, %v158
  %v160 = vpop.f32.mrf.mxu0
  %v161 = vadd.f32 %v51, %v160
  %162 = vmatprep.mubr.bf16.mxu0 0
  %163 = vmatmul.mubr.bf16.gmra.mxu0 %v118
  %v164 = vpop.f32.mrf.mxu0
  %v165 = vadd.f32 %v56, %v164
  %v166 = vpop.f32.mrf.mxu0
  %v167 = vadd.f32 %v56, %v166
  %v168 = vpop.f32.mrf.mxu0
  %v169 = vadd.f32 %v61, %v168
  %v170 = vpop.f32.mrf.mxu0
  %v171 = vadd.f32 %v61, %v170
  %172 = vdwg.mxu0
  %173 = vmatprep.subr.bf16.mxu0 0
  %174 = vmatpush1.bf16.msra.mxu0 0
  %175 = vmatprep.subr.bf16.mxu0 0
  %176 = vmatpush1.bf16.msra.mxu0 0
  %177 = vmatprep.subr.bf16.mxu0 0
  %178 = vmatpush1.bf16.msra.mxu0 0
  %179 = vmatprep.subr.bf16.mxu0 0
  %180 = vmatpush1.bf16.msra.mxu0 0
  %181 = vmatprep.subr.bf16.mxu0 0
  %182 = vmatpush1.bf16.msra.mxu0 0
  %183 = vmatprep.subr.bf16.mxu0 0
  %184 = vmatpush1.bf16.msra.mxu0 0
  %185 = vmatprep.subr.bf16.mxu0 0
  %186 = vmatpush1.bf16.msra.mxu0 0
  %187 = vmatprep.subr.bf16.mxu0 %v100
  %188 = vmatpush1.bf16.msra.mxu0 %v99
  %189 = vmatprep.subr.bf16.mxu0 0
  %190 = vmatpush2.bf16.msra.mxu0 0
  %191 = vmatprep.subr.bf16.mxu0 0
  %192 = vmatpush2.bf16.msra.mxu0 0
  %193 = vmatprep.subr.bf16.mxu0 0
  %194 = vmatpush2.bf16.msra.mxu0 0
  %195 = vmatprep.subr.bf16.mxu0 0
  %196 = vmatpush2.bf16.msra.mxu0 0
  %197 = vmatprep.subr.bf16.mxu0 0
  %198 = vmatpush2.bf16.msra.mxu0 0
  %199 = vmatprep.subr.bf16.mxu0 0
  %200 = vmatpush2.bf16.msra.mxu0 0
  %201 = vmatprep.subr.bf16.mxu0 0
  %202 = vmatpush2.bf16.msra.mxu0 0
  %203 = vmatprep.subr.bf16.mxu0 0
  %204 = vmatpush2.bf16.msra.mxu0 0
  %205 = vmatprep.mubr.bf16.mxu0 0
  %206 = vmatmul.mubr.bf16.gmra.mxu0 %v115
  %v207 = vpop.f32.mrf.mxu0
  %v208 = vadd.f32 %v46, %v207
  %v209 = vpop.f32.mrf.mxu0
  %v210 = vadd.f32 %v46, %v209
  %v211 = vpop.f32.mrf.mxu0
  %v212 = vadd.f32 %v51, %v211
  %v213 = vpop.f32.mrf.mxu0
  %v214 = vadd.f32 %v51, %v213
  %215 = vmatprep.mubr.bf16.mxu0 0
  %216 = vmatmul.mubr.bf16.gmra.mxu0 %v118
  %v217 = vpop.f32.mrf.mxu0
  %v218 = vadd.f32 %v56, %v217
  %v219 = vpop.f32.mrf.mxu0
  %v220 = vadd.f32 %v56, %v219
  %v221 = vpop.f32.mrf.mxu0
  %v222 = vadd.f32 %v61, %v221
  %v223 = vpop.f32.mrf.mxu0
  %v224 = vadd.f32 %v61, %v223
  %225 = vdwg.mxu0
  %226 = vmatprep.subr.bf16.mxu0 0
  %227 = vmatpush1.bf16.msra.mxu0 0
  %228 = vmatprep.subr.bf16.mxu0 0
  %229 = vmatpush1.bf16.msra.mxu0 0
  %230 = vmatprep.subr.bf16.mxu0 0
  %231 = vmatpush1.bf16.msra.mxu0 0
  %232 = vmatprep.subr.bf16.mxu0 0
  %233 = vmatpush1.bf16.msra.mxu0 0
  %234 = vmatprep.subr.bf16.mxu0 0
  %235 = vmatpush1.bf16.msra.mxu0 0
  %236 = vmatprep.subr.bf16.mxu0 0
  %237 = vmatpush1.bf16.msra.mxu0 0
  %238 = vmatprep.subr.bf16.mxu0 0
  %239 = vmatpush1.bf16.msra.mxu0 0
  %240 = vmatprep.subr.bf16.mxu0 %v102
  %241 = vmatpush1.bf16.msra.mxu0 %v101
  %242 = vmatprep.subr.bf16.mxu0 0
  %243 = vmatpush2.bf16.msra.mxu0 0
  %244 = vmatprep.subr.bf16.mxu0 0
  %245 = vmatpush2.bf16.msra.mxu0 0
  %246 = vmatprep.subr.bf16.mxu0 0
  %247 = vmatpush2.bf16.msra.mxu0 0
  %248 = vmatprep.subr.bf16.mxu0 0
  %249 = vmatpush2.bf16.msra.mxu0 0
  %250 = vmatprep.subr.bf16.mxu0 0
  %251 = vmatpush2.bf16.msra.mxu0 0
  %252 = vmatprep.subr.bf16.mxu0 0
  %253 = vmatpush2.bf16.msra.mxu0 0
  %254 = vmatprep.subr.bf16.mxu0 0
  %255 = vmatpush2.bf16.msra.mxu0 0
  %256 = vmatprep.subr.bf16.mxu0 0
  %257 = vmatpush2.bf16.msra.mxu0 0
  %258 = vmatprep.mubr.bf16.mxu0 0
  %259 = vmatmul.mubr.bf16.gmra.mxu0 %v115
  %v260 = vpop.f32.mrf.mxu0
  %v261 = vadd.f32 %v46, %v260
  %v262 = vpop.f32.mrf.mxu0
  %v263 = vadd.f32 %v46, %v262
  %v264 = vpop.f32.mrf.mxu0
  %v265 = vadd.f32 %v51, %v264
  %v266 = vpop.f32.mrf.mxu0
  %v267 = vadd.f32 %v51, %v266
  %268 = vmatprep.mubr.bf16.mxu0 0
  %269 = vmatmul.mubr.bf16.gmra.mxu0 %v118
  %v270 = vpop.f32.mrf.mxu0
  %v271 = vadd.f32 %v56, %v270
  %v272 = vpop.f32.mrf.mxu0
  %v273 = vadd.f32 %v56, %v272
  %v274 = vpop.f32.mrf.mxu0
  %v275 = vadd.f32 %v61, %v274
  %v276 = vpop.f32.mrf.mxu0
  %v277 = vadd.f32 %v61, %v276
  %278 = vdwg.mxu0
  %279 = vmatprep.subr.bf16.mxu0 0
  %280 = vmatpush1.bf16.msra.mxu0 0
  %281 = vmatprep.subr.bf16.mxu0 0
  %282 = vmatpush1.bf16.msra.mxu0 0
  %283 = vmatprep.subr.bf16.mxu0 0
  %284 = vmatpush1.bf16.msra.mxu0 0
  %285 = vmatprep.subr.bf16.mxu0 0
  %286 = vmatpush1.bf16.msra.mxu0 0
  %287 = vmatprep.subr.bf16.mxu0 0
  %288 = vmatpush1.bf16.msra.mxu0 0
  %289 = vmatprep.subr.bf16.mxu0 0
  %290 = vmatpush1.bf16.msra.mxu0 0
  %291 = vmatprep.subr.bf16.mxu0 0
  %292 = vmatpush1.bf16.msra.mxu0 0
  %293 = vmatprep.subr.bf16.mxu0 %v104
  %294 = vmatpush1.bf16.msra.mxu0 %v103
  %295 = vmatprep.subr.bf16.mxu0 0
  %296 = vmatpush2.bf16.msra.mxu0 0
  %297 = vmatprep.subr.bf16.mxu0 0
  %298 = vmatpush2.bf16.msra.mxu0 0
  %299 = vmatprep.subr.bf16.mxu0 0
  %300 = vmatpush2.bf16.msra.mxu0 0
  %301 = vmatprep.subr.bf16.mxu0 0
  %302 = vmatpush2.bf16.msra.mxu0 0
  %303 = vmatprep.subr.bf16.mxu0 0
  %304 = vmatpush2.bf16.msra.mxu0 0
  %305 = vmatprep.subr.bf16.mxu0 0
  %306 = vmatpush2.bf16.msra.mxu0 0
  %307 = vmatprep.subr.bf16.mxu0 0
  %308 = vmatpush2.bf16.msra.mxu0 0
  %309 = vmatprep.subr.bf16.mxu0 0
  %310 = vmatpush2.bf16.msra.mxu0 0
  %311 = vmatprep.mubr.bf16.mxu0 0
  %312 = vmatmul.mubr.bf16.gmra.mxu0 %v115
  %v313 = vpop.f32.mrf.mxu0
  %v314 = vadd.f32 %v46, %v313
  %v315 = vpop.f32.mrf.mxu0
  %v316 = vadd.f32 %v46, %v315
  %v317 = vpop.f32.mrf.mxu0
  %v318 = vadd.f32 %v51, %v317
  %v319 = vpop.f32.mrf.mxu0
  %v320 = vadd.f32 %v51, %v319
  %321 = vmatprep.mubr.bf16.mxu0 0
  %322 = vmatmul.mubr.bf16.gmra.mxu0 %v118
  %v323 = vpop.f32.mrf.mxu0
  %v324 = vadd.f32 %v56, %v323
  %v325 = vpop.f32.mrf.mxu0
  %v326 = vadd.f32 %v56, %v325
  %v327 = vpop.f32.mrf.mxu0
  %v328 = vadd.f32 %v61, %v327
  %v329 = vpop.f32.mrf.mxu0
  %v330 = vadd.f32 %v61, %v329
  %331 = vdwg.mxu0
  %v332 = vmax.f32 %v155, 0.0
  %v333 = vmax.f32 %v157, 0.0
  %v334 = vmax.f32 %v208, 0.0
  %v335 = vmax.f32 %v210, 0.0
  %v336 = vmax.f32 %v261, 0.0
  %v337 = vmax.f32 %v263, 0.0
  %v338 = vmax.f32 %v314, 0.0
  %v339 = vmax.f32 %v316, 0.0
  %v340 = vmax.f32 %v159, 0.0
  %v341 = vmax.f32 %v161, 0.0
  %v342 = vmax.f32 %v212, 0.0
  %v343 = vmax.f32 %v214, 0.0
  %v344 = vmax.f32 %v265, 0.0
  %v345 = vmax.f32 %v267, 0.0
  %v346 = vmax.f32 %v318, 0.0
  %v347 = vmax.f32 %v320, 0.0
  %v348 = vmax.f32 %v165, 0.0
  %v349 = vmax.f32 %v167, 0.0
  %v350 = vmax.f32 %v218, 0.0
  %v351 = vmax.f32 %v220, 0.0
  %v352 = vmax.f32 %v271, 0.0
  %v353 = vmax.f32 %v273, 0.0
  %v354 = vmax.f32 %v324, 0.0
  %v355 = vmax.f32 %v326, 0.0
  %v356 = vmax.f32 %v169, 0.0
  %v357 = vmax.f32 %v171, 0.0
  %v358 = vmax.f32 %v222, 0.0
  %v359 = vmax.f32 %v224, 0.0
  %v360 = vmax.f32 %v275, 0.0
  %v361 = vmax.f32 %v277, 0.0
  %v362 = vmax.f32 %v328, 0.0
  %v363 = vmax.f32 %v330, 0.0
  %v364 = vld [vmem:[%s3] sm:$0xf]
  %v365 = vld [vmem:[%s3 + $0x4] sm:$0xf]
  %v366 = vld [vmem:[%s3 + $0x8] sm:$0xf]
  %v367 = vld [vmem:[%s3 + $0xc] sm:$0xf]
  %v368 = vpack.c.bf16 %v340, %v332
  %v369 = vpack.c.bf16 %v341, %v333
  %v370 = vpack.c.bf16 %v342, %v334
  %v371 = vpack.c.bf16 %v343, %v335
  %v372 = vpack.c.bf16 %v344, %v336
  %v373 = vpack.c.bf16 %v345, %v337
  %v374 = vpack.c.bf16 %v346, %v338
  %v375 = vpack.c.bf16 %v347, %v339
  %v376 = vpack.c.bf16 %v356, %v348
  %v377 = vpack.c.bf16 %v357, %v349
  %v378 = vpack.c.bf16 %v358, %v350
  %v379 = vpack.c.bf16 %v359, %v351
  %v380 = vpack.c.bf16 %v360, %v352
  %v381 = vpack.c.bf16 %v361, %v353
  %v382 = vpack.c.bf16 %v362, %v354
  %v383 = vpack.c.bf16 %v363, %v355
  %v384 = vld [vmem:[%s4] sm:$0xff]
  %v385 = vld [vmem:[%s4 + $0x8] sm:$0xff]
  %v386 = vld [vmem:[%s4 + $0x10] sm:$0xff]
  %v387 = vld [vmem:[%s4 + $0x18] sm:$0xff]
  %389 = vset.pattern.permute.xlu0 0
  %390 = vperm.xlu0 %389, %v384
  %v391 = vpop.permute.xlu0 %390
  %394 = vset.pattern.permute.xlu0 0
  %395 = vperm.xlu0 %394, %v385
  %v396 = vpop.permute.xlu0 %395
  %399 = vset.pattern.permute.xlu0 0
  %400 = vperm.xlu0 %399, %v386
  %v401 = vpop.permute.xlu0 %400
  %404 = vset.pattern.permute.xlu0 0
  %405 = vperm.xlu0 %404, %v387
  %v406 = vpop.permute.xlu0 %405
  %v412 = vunpack.c.l.b16 %v364
  %v413 = vunpack.c.l.b16 %v365
  %v414 = vunpack.c.l.b16 %v366
  %v415 = vunpack.c.l.b16 %v367
  %v416 = vpack.c.b16 %v413, %v412
  %v417 = vpack.c.b16 %v415, %v414
  %vm418 = vcmask 261120
  %v420 = vsel %vm418, %v416, 0
  %v423 = vsel %vm418, %v417, 0
  %425 = vmatprep.subr.bf16.mxu0 0
  %426 = vmatpush1.bf16.msra.mxu0 0
  %427 = vmatprep.subr.bf16.mxu0 0
  %428 = vmatpush1.bf16.msra.mxu0 0
  %429 = vmatprep.subr.bf16.mxu0 0
  %430 = vmatpush1.bf16.msra.mxu0 0
  %431 = vmatprep.subr.bf16.mxu0 0
  %432 = vmatpush1.bf16.msra.mxu0 0
  %433 = vmatprep.subr.bf16.mxu0 0
  %434 = vmatpush1.bf16.msra.mxu0 0
  %435 = vmatprep.subr.bf16.mxu0 0
  %436 = vmatpush1.bf16.msra.mxu0 0
  %437 = vmatprep.subr.bf16.mxu0 %v377
  %438 = vmatpush1.bf16.msra.mxu0 %v376
  %439 = vmatprep.subr.bf16.mxu0 %v369
  %440 = vmatpush1.bf16.msra.mxu0 %v368
  %441 = vmatprep.subr.bf16.mxu0 0
  %442 = vmatpush2.bf16.msra.mxu0 0
  %443 = vmatprep.subr.bf16.mxu0 0
  %444 = vmatpush2.bf16.msra.mxu0 0
  %445 = vmatprep.subr.bf16.mxu0 0
  %446 = vmatpush2.bf16.msra.mxu0 0
  %447 = vmatprep.subr.bf16.mxu0 0
  %448 = vmatpush2.bf16.msra.mxu0 0
  %449 = vmatprep.subr.bf16.mxu0 0
  %450 = vmatpush2.bf16.msra.mxu0 0
  %451 = vmatprep.subr.bf16.mxu0 0
  %452 = vmatpush2.bf16.msra.mxu0 0
  %453 = vmatprep.subr.bf16.mxu0 0
  %454 = vmatpush2.bf16.msra.mxu0 0
  %455 = vmatprep.subr.bf16.mxu0 0
  %456 = vmatpush2.bf16.msra.mxu0 0
  %457 = vmatprep.mubr.bf16.mxu0 0
  %458 = vmatmul.mubr.bf16.gmra.mxu0 %v420
  %v459 = vpop.f32.mrf.mxu0
  %v460 = vadd.f32 %v391, %v459
  %v461 = vpop.f32.mrf.mxu0
  %v462 = vadd.f32 %v391, %v461
  %v463 = vpop.f32.mrf.mxu0
  %v464 = vadd.f32 %v396, %v463
  %v465 = vpop.f32.mrf.mxu0
  %v466 = vadd.f32 %v396, %v465
  %467 = vmatprep.mubr.bf16.mxu0 0
  %468 = vmatmul.mubr.bf16.gmra.mxu0 %v423
  %v469 = vpop.f32.mrf.mxu0
  %v470 = vadd.f32 %v401, %v469
  %v471 = vpop.f32.mrf.mxu0
  %v472 = vadd.f32 %v401, %v471
  %v473 = vpop.f32.mrf.mxu0
  %v474 = vadd.f32 %v406, %v473
  %v475 = vpop.f32.mrf.mxu0
  %v476 = vadd.f32 %v406, %v475
  %477 = vdwg.mxu0
  %478 = vmatprep.subr.bf16.mxu0 0
  %479 = vmatpush1.bf16.msra.mxu0 0
  %480 = vmatprep.subr.bf16.mxu0 0
  %481 = vmatpush1.bf16.msra.mxu0 0
  %482 = vmatprep.subr.bf16.mxu0 0
  %483 = vmatpush1.bf16.msra.mxu0 0
  %484 = vmatprep.subr.bf16.mxu0 0
  %485 = vmatpush1.bf16.msra.mxu0 0
  %486 = vmatprep.subr.bf16.mxu0 0
  %487 = vmatpush1.bf16.msra.mxu0 0
  %488 = vmatprep.subr.bf16.mxu0 0
  %489 = vmatpush1.bf16.msra.mxu0 0
  %490 = vmatprep.subr.bf16.mxu0 %v379
  %491 = vmatpush1.bf16.msra.mxu0 %v378
  %492 = vmatprep.subr.bf16.mxu0 %v371
  %493 = vmatpush1.bf16.msra.mxu0 %v370
  %494 = vmatprep.subr.bf16.mxu0 0
  %495 = vmatpush2.bf16.msra.mxu0 0
  %496 = vmatprep.subr.bf16.mxu0 0
  %497 = vmatpush2.bf16.msra.mxu0 0
  %498 = vmatprep.subr.bf16.mxu0 0
  %499 = vmatpush2.bf16.msra.mxu0 0
  %500 = vmatprep.subr.bf16.mxu0 0
  %501 = vmatpush2.bf16.msra.mxu0 0
  %502 = vmatprep.subr.bf16.mxu0 0
  %503 = vmatpush2.bf16.msra.mxu0 0
  %504 = vmatprep.subr.bf16.mxu0 0
  %505 = vmatpush2.bf16.msra.mxu0 0
  %506 = vmatprep.subr.bf16.mxu0 0
  %507 = vmatpush2.bf16.msra.mxu0 0
  %508 = vmatprep.subr.bf16.mxu0 0
  %509 = vmatpush2.bf16.msra.mxu0 0
  %510 = vmatprep.mubr.bf16.mxu0 0
  %511 = vmatmul.mubr.bf16.gmra.mxu0 %v420
  %v512 = vpop.f32.mrf.mxu0
  %v513 = vadd.f32 %v391, %v512
  %v514 = vpop.f32.mrf.mxu0
  %v515 = vadd.f32 %v391, %v514
  %v516 = vpop.f32.mrf.mxu0
  %v517 = vadd.f32 %v396, %v516
  %v518 = vpop.f32.mrf.mxu0
  %v519 = vadd.f32 %v396, %v518
  %520 = vmatprep.mubr.bf16.mxu0 0
  %521 = vmatmul.mubr.bf16.gmra.mxu0 %v423
  %v522 = vpop.f32.mrf.mxu0
  %v523 = vadd.f32 %v401, %v522
  %v524 = vpop.f32.mrf.mxu0
  %v525 = vadd.f32 %v401, %v524
  %v526 = vpop.f32.mrf.mxu0
  %v527 = vadd.f32 %v406, %v526
  %v528 = vpop.f32.mrf.mxu0
  %v529 = vadd.f32 %v406, %v528
  %530 = vdwg.mxu0
  %531 = vmatprep.subr.bf16.mxu0 0
  %532 = vmatpush1.bf16.msra.mxu0 0
  %533 = vmatprep.subr.bf16.mxu0 0
  %534 = vmatpush1.bf16.msra.mxu0 0
  %535 = vmatprep.subr.bf16.mxu0 0
  %536 = vmatpush1.bf16.msra.mxu0 0
  %537 = vmatprep.subr.bf16.mxu0 0
  %538 = vmatpush1.bf16.msra.mxu0 0
  %539 = vmatprep.subr.bf16.mxu0 0
  %540 = vmatpush1.bf16.msra.mxu0 0
  %541 = vmatprep.subr.bf16.mxu0 0
  %542 = vmatpush1.bf16.msra.mxu0 0
  %543 = vmatprep.subr.bf16.mxu0 %v381
  %544 = vmatpush1.bf16.msra.mxu0 %v380
  %545 = vmatprep.subr.bf16.mxu0 %v373
  %546 = vmatpush1.bf16.msra.mxu0 %v372
  %547 = vmatprep.subr.bf16.mxu0 0
  %548 = vmatpush2.bf16.msra.mxu0 0
  %549 = vmatprep.subr.bf16.mxu0 0
  %550 = vmatpush2.bf16.msra.mxu0 0
  %551 = vmatprep.subr.bf16.mxu0 0
  %552 = vmatpush2.bf16.msra.mxu0 0
  %553 = vmatprep.subr.bf16.mxu0 0
  %554 = vmatpush2.bf16.msra.mxu0 0
  %555 = vmatprep.subr.bf16.mxu0 0
  %556 = vmatpush2.bf16.msra.mxu0 0
  %557 = vmatprep.subr.bf16.mxu0 0
  %558 = vmatpush2.bf16.msra.mxu0 0
  %559 = vmatprep.subr.bf16.mxu0 0
  %560 = vmatpush2.bf16.msra.mxu0 0
  %561 = vmatprep.subr.bf16.mxu0 0
  %562 = vmatpush2.bf16.msra.mxu0 0
  %563 = vmatprep.mubr.bf16.mxu0 0
  %564 = vmatmul.mubr.bf16.gmra.mxu0 %v420
  %v565 = vpop.f32.mrf.mxu0
  %v566 = vadd.f32 %v391, %v565
  %v567 = vpop.f32.mrf.mxu0
  %v568 = vadd.f32 %v391, %v567
  %v569 = vpop.f32.mrf.mxu0
  %v570 = vadd.f32 %v396, %v569
  %v571 = vpop.f32.mrf.mxu0
  %v572 = vadd.f32 %v396, %v571
  %573 = vmatprep.mubr.bf16.mxu0 0
  %574 = vmatmul.mubr.bf16.gmra.mxu0 %v423
  %v575 = vpop.f32.mrf.mxu0
  %v576 = vadd.f32 %v401, %v575
  %v577 = vpop.f32.mrf.mxu0
  %v578 = vadd.f32 %v401, %v577
  %v579 = vpop.f32.mrf.mxu0
  %v580 = vadd.f32 %v406, %v579
  %v581 = vpop.f32.mrf.mxu0
  %v582 = vadd.f32 %v406, %v581
  %583 = vdwg.mxu0
  %584 = vmatprep.subr.bf16.mxu0 0
  %585 = vmatpush1.bf16.msra.mxu0 0
  %586 = vmatprep.subr.bf16.mxu0 0
  %587 = vmatpush1.bf16.msra.mxu0 0
  %588 = vmatprep.subr.bf16.mxu0 0
  %589 = vmatpush1.bf16.msra.mxu0 0
  %590 = vmatprep.subr.bf16.mxu0 0
  %591 = vmatpush1.bf16.msra.mxu0 0
  %592 = vmatprep.subr.bf16.mxu0 0
  %593 = vmatpush1.bf16.msra.mxu0 0
  %594 = vmatprep.subr.bf16.mxu0 0
  %595 = vmatpush1.bf16.msra.mxu0 0
  %596 = vmatprep.subr.bf16.mxu0 %v383
  %597 = vmatpush1.bf16.msra.mxu0 %v382
  %598 = vmatprep.subr.bf16.mxu0 %v375
  %599 = vmatpush1.bf16.msra.mxu0 %v374
  %600 = vmatprep.subr.bf16.mxu0 0
  %601 = vmatpush2.bf16.msra.mxu0 0
  %602 = vmatprep.subr.bf16.mxu0 0
  %603 = vmatpush2.bf16.msra.mxu0 0
  %604 = vmatprep.subr.bf16.mxu0 0
  %605 = vmatpush2.bf16.msra.mxu0 0
  %606 = vmatprep.subr.bf16.mxu0 0
  %607 = vmatpush2.bf16.msra.mxu0 0
  %608 = vmatprep.subr.bf16.mxu0 0
  %609 = vmatpush2.bf16.msra.mxu0 0
  %610 = vmatprep.subr.bf16.mxu0 0
  %611 = vmatpush2.bf16.msra.mxu0 0
  %612 = vmatprep.subr.bf16.mxu0 0
  %613 = vmatpush2.bf16.msra.mxu0 0
  %614 = vmatprep.subr.bf16.mxu0 0
  %615 = vmatpush2.bf16.msra.mxu0 0
  %616 = vmatprep.mubr.bf16.mxu0 0
  %617 = vmatmul.mubr.bf16.gmra.mxu0 %v420
  %v618 = vpop.f32.mrf.mxu0
  %v619 = vadd.f32 %v391, %v618
  %v620 = vpop.f32.mrf.mxu0
  %v621 = vadd.f32 %v391, %v620
  %v622 = vpop.f32.mrf.mxu0
  %v623 = vadd.f32 %v396, %v622
  %v624 = vpop.f32.mrf.mxu0
  %v625 = vadd.f32 %v396, %v624
  %626 = vmatprep.mubr.bf16.mxu0 0
  %627 = vmatmul.mubr.bf16.gmra.mxu0 %v423
  %v628 = vpop.f32.mrf.mxu0
  %v629 = vadd.f32 %v401, %v628
  %v630 = vpop.f32.mrf.mxu0
  %v631 = vadd.f32 %v401, %v630
  %v632 = vpop.f32.mrf.mxu0
  %v633 = vadd.f32 %v406, %v632
  %v634 = vpop.f32.mrf.mxu0
  %v635 = vadd.f32 %v406, %v634
  %636 = vdwg.mxu0
  %v637 = vmax.f32 %v460, 0.0
  %v638 = vmax.f32 %v462, 0.0
  %v639 = vmax.f32 %v513, 0.0
  %v640 = vmax.f32 %v515, 0.0
  %v641 = vmax.f32 %v566, 0.0
  %v642 = vmax.f32 %v568, 0.0
  %v643 = vmax.f32 %v619, 0.0
  %v644 = vmax.f32 %v621, 0.0
  %v645 = vmax.f32 %v464, 0.0
  %v646 = vmax.f32 %v466, 0.0
  %v647 = vmax.f32 %v517, 0.0
  %v648 = vmax.f32 %v519, 0.0
  %v649 = vmax.f32 %v570, 0.0
  %v650 = vmax.f32 %v572, 0.0
  %v651 = vmax.f32 %v623, 0.0
  %v652 = vmax.f32 %v625, 0.0
  %v653 = vmax.f32 %v470, 0.0
  %v654 = vmax.f32 %v472, 0.0
  %v655 = vmax.f32 %v523, 0.0
  %v656 = vmax.f32 %v525, 0.0
  %v657 = vmax.f32 %v576, 0.0
  %v658 = vmax.f32 %v578, 0.0
  %v659 = vmax.f32 %v629, 0.0
  %v660 = vmax.f32 %v631, 0.0
  %v661 = vmax.f32 %v474, 0.0
  %v662 = vmax.f32 %v476, 0.0
  %v663 = vmax.f32 %v527, 0.0
  %v664 = vmax.f32 %v529, 0.0
  %v665 = vmax.f32 %v580, 0.0
  %v666 = vmax.f32 %v582, 0.0
  %v667 = vmax.f32 %v633, 0.0
  %v668 = vmax.f32 %v635, 0.0
  %v669 = vld [vmem:[%s5] sm:$0xf]
  %v670 = vld [vmem:[%s5 + $0x4] sm:$0xf]
  %v671 = vld [vmem:[%s5 + $0x8] sm:$0xf]
  %v672 = vld [vmem:[%s5 + $0xc] sm:$0xf]
  %v673 = vpack.c.bf16 %v645, %v637
  %v674 = vpack.c.bf16 %v646, %v638
  %v675 = vpack.c.bf16 %v647, %v639
  %v676 = vpack.c.bf16 %v648, %v640
  %v677 = vpack.c.bf16 %v649, %v641
  %v678 = vpack.c.bf16 %v650, %v642
  %v679 = vpack.c.bf16 %v651, %v643
  %v680 = vpack.c.bf16 %v652, %v644
  %v681 = vpack.c.bf16 %v661, %v653
  %v682 = vpack.c.bf16 %v662, %v654
  %v683 = vpack.c.bf16 %v663, %v655
  %v684 = vpack.c.bf16 %v664, %v656
  %v685 = vpack.c.bf16 %v665, %v657
  %v686 = vpack.c.bf16 %v666, %v658
  %v687 = vpack.c.bf16 %v667, %v659
  %v688 = vpack.c.bf16 %v668, %v660
  %v689 = vld [vmem:[%s6] sm:$0xff]
  %v690 = vld [vmem:[%s6 + $0x8] sm:$0xff]
  %v691 = vld [vmem:[%s6 + $0x10] sm:$0xff]
  %v692 = vld [vmem:[%s6 + $0x18] sm:$0xff]
  %694 = vset.pattern.permute.xlu0 0
  %695 = vperm.xlu0 %694, %v689
  %v696 = vpop.permute.xlu0 %695
  %699 = vset.pattern.permute.xlu0 0
  %700 = vperm.xlu0 %699, %v690
  %v701 = vpop.permute.xlu0 %700
  %704 = vset.pattern.permute.xlu0 0
  %705 = vperm.xlu0 %704, %v691
  %v706 = vpop.permute.xlu0 %705
  %709 = vset.pattern.permute.xlu0 0
  %710 = vperm.xlu0 %709, %v692
  %v711 = vpop.permute.xlu0 %710
  %v717 = vunpack.c.l.b16 %v669
  %v718 = vunpack.c.l.b16 %v670
  %v719 = vunpack.c.l.b16 %v671
  %v720 = vunpack.c.l.b16 %v672
  %v721 = vpack.c.b16 %v718, %v717
  %v722 = vpack.c.b16 %v720, %v719
  %v724 = vsel %vm418, %v721, 0
  %v727 = vsel %vm418, %v722, 0
  %729 = vmatprep.subr.bf16.mxu0 0
  %730 = vmatpush1.bf16.msra.mxu0 0
  %731 = vmatprep.subr.bf16.mxu0 0
  %732 = vmatpush1.bf16.msra.mxu0 0
  %733 = vmatprep.subr.bf16.mxu0 0
  %734 = vmatpush1.bf16.msra.mxu0 0
  %735 = vmatprep.subr.bf16.mxu0 0
  %736 = vmatpush1.bf16.msra.mxu0 0
  %737 = vmatprep.subr.bf16.mxu0 0
  %738 = vmatpush1.bf16.msra.mxu0 0
  %739 = vmatprep.subr.bf16.mxu0 0
  %740 = vmatpush1.bf16.msra.mxu0 0
  %741 = vmatprep.subr.bf16.mxu0 %v682
  %742 = vmatpush1.bf16.msra.mxu0 %v681
  %743 = vmatprep.subr.bf16.mxu0 %v674
  %744 = vmatpush1.bf16.msra.mxu0 %v673
  %745 = vmatprep.subr.bf16.mxu0 0
  %746 = vmatpush2.bf16.msra.mxu0 0
  %747 = vmatprep.subr.bf16.mxu0 0
  %748 = vmatpush2.bf16.msra.mxu0 0
  %749 = vmatprep.subr.bf16.mxu0 0
  %750 = vmatpush2.bf16.msra.mxu0 0
  %751 = vmatprep.subr.bf16.mxu0 0
  %752 = vmatpush2.bf16.msra.mxu0 0
  %753 = vmatprep.subr.bf16.mxu0 0
  %754 = vmatpush2.bf16.msra.mxu0 0
  %755 = vmatprep.subr.bf16.mxu0 0
  %756 = vmatpush2.bf16.msra.mxu0 0
  %757 = vmatprep.subr.bf16.mxu0 0
  %758 = vmatpush2.bf16.msra.mxu0 0
  %759 = vmatprep.subr.bf16.mxu0 0
  %760 = vmatpush2.bf16.msra.mxu0 0
  %761 = vmatprep.mubr.bf16.mxu0 0
  %762 = vmatmul.mubr.bf16.gmra.mxu0 %v724
  %v763 = vpop.f32.mrf.mxu0
  %v764 = vadd.f32 %v696, %v763
  %v765 = vpop.f32.mrf.mxu0
  %v766 = vadd.f32 %v696, %v765
  %v767 = vpop.f32.mrf.mxu0
  %v768 = vadd.f32 %v701, %v767
  %v769 = vpop.f32.mrf.mxu0
  %v770 = vadd.f32 %v701, %v769
  %771 = vmatprep.mubr.bf16.mxu0 0
  %772 = vmatmul.mubr.bf16.gmra.mxu0 %v727
  %v773 = vpop.f32.mrf.mxu0
  %v774 = vadd.f32 %v706, %v773
  %v775 = vpop.f32.mrf.mxu0
  %v776 = vadd.f32 %v706, %v775
  %v777 = vpop.f32.mrf.mxu0
  %v778 = vadd.f32 %v711, %v777
  %v779 = vpop.f32.mrf.mxu0
  %v780 = vadd.f32 %v711, %v779
  %781 = vdwg.mxu0
  %782 = vmatprep.subr.bf16.mxu0 0
  %783 = vmatpush1.bf16.msra.mxu0 0
  %784 = vmatprep.subr.bf16.mxu0 0
  %785 = vmatpush1.bf16.msra.mxu0 0
  %786 = vmatprep.subr.bf16.mxu0 0
  %787 = vmatpush1.bf16.msra.mxu0 0
  %788 = vmatprep.subr.bf16.mxu0 0
  %789 = vmatpush1.bf16.msra.mxu0 0
  %790 = vmatprep.subr.bf16.mxu0 0
  %791 = vmatpush1.bf16.msra.mxu0 0
  %792 = vmatprep.subr.bf16.mxu0 0
  %793 = vmatpush1.bf16.msra.mxu0 0
  %794 = vmatprep.subr.bf16.mxu0 %v684
  %795 = vmatpush1.bf16.msra.mxu0 %v683
  %796 = vmatprep.subr.bf16.mxu0 %v676
  %797 = vmatpush1.bf16.msra.mxu0 %v675
  %798 = vmatprep.subr.bf16.mxu0 0
  %799 = vmatpush2.bf16.msra.mxu0 0
  %800 = vmatprep.subr.bf16.mxu0 0
  %801 = vmatpush2.bf16.msra.mxu0 0
  %802 = vmatprep.subr.bf16.mxu0 0
  %803 = vmatpush2.bf16.msra.mxu0 0
  %804 = vmatprep.subr.bf16.mxu0 0
  %805 = vmatpush2.bf16.msra.mxu0 0
  %806 = vmatprep.subr.bf16.mxu0 0
  %807 = vmatpush2.bf16.msra.mxu0 0
  %808 = vmatprep.subr.bf16.mxu0 0
  %809 = vmatpush2.bf16.msra.mxu0 0
  %810 = vmatprep.subr.bf16.mxu0 0
  %811 = vmatpush2.bf16.msra.mxu0 0
  %812 = vmatprep.subr.bf16.mxu0 0
  %813 = vmatpush2.bf16.msra.mxu0 0
  %814 = vmatprep.mubr.bf16.mxu0 0
  %815 = vmatmul.mubr.bf16.gmra.mxu0 %v724
  %v816 = vpop.f32.mrf.mxu0
  %v817 = vadd.f32 %v696, %v816
  %v818 = vpop.f32.mrf.mxu0
  %v819 = vadd.f32 %v696, %v818
  %v820 = vpop.f32.mrf.mxu0
  %v821 = vadd.f32 %v701, %v820
  %v822 = vpop.f32.mrf.mxu0
  %v823 = vadd.f32 %v701, %v822
  %824 = vmatprep.mubr.bf16.mxu0 0
  %825 = vmatmul.mubr.bf16.gmra.mxu0 %v727
  %v826 = vpop.f32.mrf.mxu0
  %v827 = vadd.f32 %v706, %v826
  %v828 = vpop.f32.mrf.mxu0
  %v829 = vadd.f32 %v706, %v828
  %v830 = vpop.f32.mrf.mxu0
  %v831 = vadd.f32 %v711, %v830
  %v832 = vpop.f32.mrf.mxu0
  %v833 = vadd.f32 %v711, %v832
  %834 = vdwg.mxu0
  %835 = vmatprep.subr.bf16.mxu0 0
  %836 = vmatpush1.bf16.msra.mxu0 0
  %837 = vmatprep.subr.bf16.mxu0 0
  %838 = vmatpush1.bf16.msra.mxu0 0
  %839 = vmatprep.subr.bf16.mxu0 0
  %840 = vmatpush1.bf16.msra.mxu0 0
  %841 = vmatprep.subr.bf16.mxu0 0
  %842 = vmatpush1.bf16.msra.mxu0 0
  %843 = vmatprep.subr.bf16.mxu0 0
  %844 = vmatpush1.bf16.msra.mxu0 0
  %845 = vmatprep.subr.bf16.mxu0 0
  %846 = vmatpush1.bf16.msra.mxu0 0
  %847 = vmatprep.subr.bf16.mxu0 %v686
  %848 = vmatpush1.bf16.msra.mxu0 %v685
  %849 = vmatprep.subr.bf16.mxu0 %v678
  %850 = vmatpush1.bf16.msra.mxu0 %v677
  %851 = vmatprep.subr.bf16.mxu0 0
  %852 = vmatpush2.bf16.msra.mxu0 0
  %853 = vmatprep.subr.bf16.mxu0 0
  %854 = vmatpush2.bf16.msra.mxu0 0
  %855 = vmatprep.subr.bf16.mxu0 0
  %856 = vmatpush2.bf16.msra.mxu0 0
  %857 = vmatprep.subr.bf16.mxu0 0
  %858 = vmatpush2.bf16.msra.mxu0 0
  %859 = vmatprep.subr.bf16.mxu0 0
  %860 = vmatpush2.bf16.msra.mxu0 0
  %861 = vmatprep.subr.bf16.mxu0 0
  %862 = vmatpush2.bf16.msra.mxu0 0
  %863 = vmatprep.subr.bf16.mxu0 0
  %864 = vmatpush2.bf16.msra.mxu0 0
  %865 = vmatprep.subr.bf16.mxu0 0
  %866 = vmatpush2.bf16.msra.mxu0 0
  %867 = vmatprep.mubr.bf16.mxu0 0
  %868 = vmatmul.mubr.bf16.gmra.mxu0 %v724
  %v869 = vpop.f32.mrf.mxu0
  %v870 = vadd.f32 %v696, %v869
  %v871 = vpop.f32.mrf.mxu0
  %v872 = vadd.f32 %v696, %v871
  %v873 = vpop.f32.mrf.mxu0
  %v874 = vadd.f32 %v701, %v873
  %v875 = vpop.f32.mrf.mxu0
  %v876 = vadd.f32 %v701, %v875
  %877 = vmatprep.mubr.bf16.mxu0 0
  %878 = vmatmul.mubr.bf16.gmra.mxu0 %v727
  %v879 = vpop.f32.mrf.mxu0
  %v880 = vadd.f32 %v706, %v879
  %v881 = vpop.f32.mrf.mxu0
  %v882 = vadd.f32 %v706, %v881
  %v883 = vpop.f32.mrf.mxu0
  %v884 = vadd.f32 %v711, %v883
  %v885 = vpop.f32.mrf.mxu0
  %v886 = vadd.f32 %v711, %v885
  %887 = vdwg.mxu0
  %888 = vmatprep.subr.bf16.mxu0 0
  %889 = vmatpush1.bf16.msra.mxu0 0
  %890 = vmatprep.subr.bf16.mxu0 0
  %891 = vmatpush1.bf16.msra.mxu0 0
  %892 = vmatprep.subr.bf16.mxu0 0
  %893 = vmatpush1.bf16.msra.mxu0 0
  %894 = vmatprep.subr.bf16.mxu0 0
  %895 = vmatpush1.bf16.msra.mxu0 0
  %896 = vmatprep.subr.bf16.mxu0 0
  %897 = vmatpush1.bf16.msra.mxu0 0
  %898 = vmatprep.subr.bf16.mxu0 0
  %899 = vmatpush1.bf16.msra.mxu0 0
  %900 = vmatprep.subr.bf16.mxu0 %v688
  %901 = vmatpush1.bf16.msra.mxu0 %v687
  %902 = vmatprep.subr.bf16.mxu0 %v680
  %903 = vmatpush1.bf16.msra.mxu0 %v679
  %904 = vmatprep.subr.bf16.mxu0 0
  %905 = vmatpush2.bf16.msra.mxu0 0
  %906 = vmatprep.subr.bf16.mxu0 0
  %907 = vmatpush2.bf16.msra.mxu0 0
  %908 = vmatprep.subr.bf16.mxu0 0
  %909 = vmatpush2.bf16.msra.mxu0 0
  %910 = vmatprep.subr.bf16.mxu0 0
  %911 = vmatpush2.bf16.msra.mxu0 0
  %912 = vmatprep.subr.bf16.mxu0 0
  %913 = vmatpush2.bf16.msra.mxu0 0
  %914 = vmatprep.subr.bf16.mxu0 0
  %915 = vmatpush2.bf16.msra.mxu0 0
  %916 = vmatprep.subr.bf16.mxu0 0
  %917 = vmatpush2.bf16.msra.mxu0 0
  %918 = vmatprep.subr.bf16.mxu0 0
  %919 = vmatpush2.bf16.msra.mxu0 0
  %920 = vmatprep.mubr.bf16.mxu0 0
  %921 = vmatmul.mubr.bf16.gmra.mxu0 %v724
  %v922 = vpop.f32.mrf.mxu0
  %v923 = vadd.f32 %v696, %v922
  %v924 = vpop.f32.mrf.mxu0
  %v925 = vadd.f32 %v696, %v924
  %v926 = vpop.f32.mrf.mxu0
  %v927 = vadd.f32 %v701, %v926
  %v928 = vpop.f32.mrf.mxu0
  %v929 = vadd.f32 %v701, %v928
  %930 = vmatprep.mubr.bf16.mxu0 0
  %931 = vmatmul.mubr.bf16.gmra.mxu0 %v727
  %v932 = vpop.f32.mrf.mxu0
  %v933 = vadd.f32 %v706, %v932
  %v934 = vpop.f32.mrf.mxu0
  %v935 = vadd.f32 %v706, %v934
  %v936 = vpop.f32.mrf.mxu0
  %v937 = vadd.f32 %v711, %v936
  %v938 = vpop.f32.mrf.mxu0
  %v939 = vadd.f32 %v711, %v938
  %940 = vdwg.mxu0
  %v941 = vmax.f32 %v764, 0.0
  %v942 = vmax.f32 %v766, 0.0
  %v943 = vmax.f32 %v817, 0.0
  %v944 = vmax.f32 %v819, 0.0
  %v945 = vmax.f32 %v870, 0.0
  %v946 = vmax.f32 %v872, 0.0
  %v947 = vmax.f32 %v923, 0.0
  %v948 = vmax.f32 %v925, 0.0
  %v949 = vmax.f32 %v768, 0.0
  %v950 = vmax.f32 %v770, 0.0
  %v951 = vmax.f32 %v821, 0.0
  %v952 = vmax.f32 %v823, 0.0
  %v953 = vmax.f32 %v874, 0.0
  %v954 = vmax.f32 %v876, 0.0
  %v955 = vmax.f32 %v927, 0.0
  %v956 = vmax.f32 %v929, 0.0
  %v957 = vmax.f32 %v774, 0.0
  %v958 = vmax.f32 %v776, 0.0
  %v959 = vmax.f32 %v827, 0.0
  %v960 = vmax.f32 %v829, 0.0
  %v961 = vmax.f32 %v880, 0.0
  %v962 = vmax.f32 %v882, 0.0
  %v963 = vmax.f32 %v933, 0.0
  %v964 = vmax.f32 %v935, 0.0
  %v965 = vmax.f32 %v778, 0.0
  %v966 = vmax.f32 %v780, 0.0
  %v967 = vmax.f32 %v831, 0.0
  %v968 = vmax.f32 %v833, 0.0
  %v969 = vmax.f32 %v884, 0.0
  %v970 = vmax.f32 %v886, 0.0
  %v971 = vmax.f32 %v937, 0.0
  %v972 = vmax.f32 %v939, 0.0
  %v973 = vpack.c.bf16 %v949, %v941
  %v974 = vpack.c.bf16 %v950, %v942
  %v975 = vpack.c.bf16 %v951, %v943
  %v976 = vpack.c.bf16 %v952, %v944
  %v977 = vpack.c.bf16 %v953, %v945
  %v978 = vpack.c.bf16 %v954, %v946
  %v979 = vpack.c.bf16 %v955, %v947
  %v980 = vpack.c.bf16 %v956, %v948
  %v981 = vpack.c.bf16 %v965, %v957
  %v982 = vpack.c.bf16 %v966, %v958
  %v983 = vpack.c.bf16 %v967, %v959
  %v984 = vpack.c.bf16 %v968, %v960
  %v985 = vpack.c.bf16 %v969, %v961
  %v986 = vpack.c.bf16 %v970, %v962
  %v987 = vpack.c.bf16 %v971, %v963
  %v988 = vpack.c.bf16 %v972, %v964
  %v1005 = vunpack.c.l.b16 %v973
  %v1006 = vunpack.c.l.b16 %v974
  %v1007 = vunpack.c.l.b16 %v975
  %v1008 = vunpack.c.l.b16 %v976
  %v1009 = vunpack.c.l.b16 %v977
  %v1010 = vunpack.c.l.b16 %v978
  %v1011 = vunpack.c.l.b16 %v979
  %v1012 = vunpack.c.l.b16 %v980
  %v1013 = vunpack.c.h.b16 %v973
  %v1014 = vunpack.c.h.b16 %v974
  %v1015 = vunpack.c.h.b16 %v975
  %v1016 = vunpack.c.h.b16 %v976
  %v1017 = vunpack.c.h.b16 %v977
  %v1018 = vunpack.c.h.b16 %v978
  %v1019 = vunpack.c.h.b16 %v979
  %v1020 = vunpack.c.h.b16 %v980
  %v1021 = vunpack.c.l.b16 %v981
  %v1022 = vunpack.c.l.b16 %v982
  %v1023 = vunpack.c.l.b16 %v983
  %v1024 = vunpack.c.l.b16 %v984
  %v1025 = vunpack.c.l.b16 %v985
  %v1026 = vunpack.c.l.b16 %v986
  %v1027 = vunpack.c.l.b16 %v987
  %v1028 = vunpack.c.l.b16 %v988
  %v1029 = vunpack.c.h.b16 %v981
  %v1030 = vunpack.c.h.b16 %v982
  %v1031 = vunpack.c.h.b16 %v983
  %v1032 = vunpack.c.h.b16 %v984
  %v1033 = vunpack.c.h.b16 %v985
  %v1034 = vunpack.c.h.b16 %v986
  %v1035 = vunpack.c.h.b16 %v987
  %v1036 = vunpack.c.h.b16 %v988
  %v1037 = vpack.c.b16 %v1006, %v1005
  %v1038 = vpack.c.b16 %v1008, %v1007
  %v1039 = vpack.c.b16 %v1010, %v1009
  %v1040 = vpack.c.b16 %v1012, %v1011
  %v1041 = vpack.c.b16 %v1014, %v1013
  %v1042 = vpack.c.b16 %v1016, %v1015
  %v1043 = vpack.c.b16 %v1018, %v1017
  %v1044 = vpack.c.b16 %v1020, %v1019
  %v1045 = vpack.c.b16 %v1022, %v1021
  %v1046 = vpack.c.b16 %v1024, %v1023
  %v1047 = vpack.c.b16 %v1026, %v1025
  %v1048 = vpack.c.b16 %v1028, %v1027
  %v1049 = vpack.c.b16 %v1030, %v1029
  %v1050 = vpack.c.b16 %v1032, %v1031
  %v1051 = vpack.c.b16 %v1034, %v1033
  %v1052 = vpack.c.b16 %v1036, %v1035
  %1069 = vst [vmem:[%s7] sm:$0xff] %v1037
  %1070 = vst [vmem:[%s7 + $0x8] sm:$0xff] %v1038
  %1071 = vst [vmem:[%s7 + $0x10] sm:$0xff] %v1039
  %1072 = vst [vmem:[%s7 + $0x18] sm:$0xff] %v1040
  %1073 = vst [vmem:[%s7 + $0x20] sm:$0xff] %v1041
  %1074 = vst [vmem:[%s7 + $0x28] sm:$0xff] %v1042
  %1075 = vst [vmem:[%s7 + $0x30] sm:$0xff] %v1043
  %1076 = vst [vmem:[%s7 + $0x38] sm:$0xff] %v1044
  %1077 = vst [vmem:[%s7 + $0x40] sm:$0xff] %v1045
  %1078 = vst [vmem:[%s7 + $0x48] sm:$0xff] %v1046
  %1079 = vst [vmem:[%s7 + $0x50] sm:$0xff] %v1047
  %1080 = vst [vmem:[%s7 + $0x58] sm:$0xff] %v1048
  %1081 = vst [vmem:[%s7 + $0x60] sm:$0xff] %v1049
  %1082 = vst [vmem:[%s7 + $0x68] sm:$0xff] %v1050
  %1083 = vst [vmem:[%s7 + $0x70] sm:$0xff] %v1051
  %1084 = vst [vmem:[%s7 + $0x78] sm:$0xff] %v1052
  // Predicated region
  $region30: #{particlenet_edgenet.1} parent=0 // pred_check
    _
  $region31: #{particlenet_edgenet.1} parent=0 // pred_check_branch
    %1086 = sbr.rel (0) target = $region33
  $region32: #{particlenet_edgenet.1} parent=0 // pred_region
    _
  $region33: #{particlenet_edgenet.1} parent=0 // pred_fallthru
    _
  // Predicated region
  $region34: #{particlenet_edgenet.1} parent=0 // pred_check
    _
  $region35: #{particlenet_edgenet.1} parent=0 // pred_check_branch
    %1088 = sbr.rel (0) target = $region37
  $region36: #{particlenet_edgenet.1} parent=0 // pred_region
    _
  $region37: #{particlenet_edgenet.1} parent=0 // pred_fallthru
    _

</llo_original>
